<compile_context>
chip_gen: v6e
topology: v6e:2x2x1
jax: 0.10.0
libtpu: 0.0.40
codegen_flags: <defaults>
</compile_context>

<pallas_src>
import functools
import math

import jax
import jax.numpy as jnp
from jax import lax
from jax.experimental import pallas as pl
from jax.experimental.pallas import tpu as pltpu

_LANE = 128
_SUBLANE = 8
_NEG_BIG = -1e30  # finite "-inf" bias for padded classifier columns


def _round_up(a, b):
    return -(-a // b) * b


def _gelu_exact(x):
    # torch.nn.GELU() default is the exact erf-based GELU (computed in f32).
    return 0.5 * x * (1.0 + lax.erf(x * (1.0 / math.sqrt(2.0))))


def edge_category_kernel(x_ref, w1_ref, b1_ref, w2_ref, b2_ref, w3_ref, b3_ref,
                         o_ref, *, d_out):
    # x arrives as f32; cast to bf16 on the VPU (hidden under the input DMA).
    x = x_ref[...].astype(jnp.bfloat16)

    # linear1 + GELU (bf16 operands, f32 MXU accumulation, f32 activation)
    h = jnp.dot(x, w1_ref[...], preferred_element_type=jnp.float32) + b1_ref[...]
    h = _gelu_exact(h).astype(jnp.bfloat16)

    # linear2 + GELU
    h = jnp.dot(h, w2_ref[...], preferred_element_type=jnp.float32) + b2_ref[...]
    h = _gelu_exact(h).astype(jnp.bfloat16)

    # classifier: lane-dense 128-wide logits; the padded columns carry a -1e30
    # bias so exp() drives them to exactly 0 and they never affect the softmax.
    logits = jnp.dot(h, w3_ref[...], preferred_element_type=jnp.float32) + b3_ref[...]

    # numerically stable softmax; EUP reciprocal instead of a VALU divide
    m = jnp.max(logits, axis=-1, keepdims=True)
    e = jnp.exp(logits - m)
    denom = jnp.sum(e, axis=-1, keepdims=True)
    probs = e * pl.reciprocal(denom, approx=True)

    # Narrow store: only the real classes go to HBM.
    o_ref[...] = probs[:, :d_out].astype(o_ref.dtype)


def prepare_params(params):
    """One-time, x-independent weight prep (hoisted out of the forward path).

    Weights are stored as (in, out) = torch weight.T. Matmul operands go to
    bf16; biases stay f32 (added after the f32 accumulation). The classifier
    weight/bias are lane-padded to 128 columns; padded bias = -1e30.
    """
    d_out = params["w3"].shape[1]
    pad = _round_up(d_out, _LANE) - d_out
    w3p = jnp.pad(params["w3"], ((0, 0), (0, pad)))
    b3p = jnp.pad(params["b3"], ((0, 0), (0, pad)), constant_values=_NEG_BIG)
    return {
        "w1": params["w1"].astype(jnp.bfloat16),
        "b1": params["b1"].astype(jnp.float32),
        "w2": params["w2"].astype(jnp.bfloat16),
        "b2": params["b2"].astype(jnp.float32),
        "w3": w3p.astype(jnp.bfloat16),
        "b3": b3p.astype(jnp.float32),   # must stay f32 (pad bias precision)
        "d_out": d_out,
    }


def edge_category_forward(x, prepped, *, block_m=2048, min_grid_steps=1):
    """x: (N, d_in) f32.  prepped: output of prepare_params().

    min_grid_steps: keep 1-2 on v5e/v6e (single TensorCore); use >=4 (even)
    on v7x so the 'parallel' row axis can be sharded across its 2 TCs.
    """
    N, d_in = x.shape
    w1, b1 = prepped["w1"], prepped["b1"]
    w2, b2 = prepped["w2"], prepped["b2"]
    w3, b3 = prepped["w3"], prepped["b3"]
    d_out = prepped["d_out"]
    h0, h1, d_out_pad = w1.shape[1], w2.shape[1], w3.shape[1]

    # Row tile: as large as possible (big tiles are the main mem-bound lever),
    # multiple of the sublane granularity; optionally keep >= min_grid_steps.
    bm = min(block_m, _round_up(N, _SUBLANE))
    if min_grid_steps > 1:
        bm = min(bm, _round_up(pl.cdiv(N, min_grid_steps), _SUBLANE))
    bm = max(_SUBLANE, bm)
    grid = (pl.cdiv(N, bm),)   # partial last block is masked by Pallas

    full = lambda a: pl.BlockSpec(a.shape, lambda i: (0,) * a.ndim)

    cost = pl.CostEstimate(
        flops=2 * N * (d_in * h0 + h0 * h1 + h1 * d_out_pad),
        transcendentals=N * (h0 + h1 + d_out_pad),
        bytes_accessed=(N * d_in * 4 + N * d_out * 4
                        + (w1.size + w2.size + w3.size) * 2
                        + (b1.size + b2.size + b3.size) * 4),
    )

    out = pl.pallas_call(
        functools.partial(edge_category_kernel, d_out=d_out),
        out_shape=jax.ShapeDtypeStruct((N, d_out), jnp.float32),
        grid_spec=pltpu.PrefetchScalarGridSpec(
            num_scalar_prefetch=0,
            grid=grid,
            in_specs=[
                pl.BlockSpec((bm, d_in), lambda i: (i, 0)),   # streaming x tile
                full(w1), full(b1),
                full(w2), full(b2),
                full(w3), full(b3),
            ],
            out_specs=pl.BlockSpec((bm, d_out), lambda i: (i, 0)),
        ),
        compiler_params=pltpu.CompilerParams(
            dimension_semantics=("parallel",)),
        cost_estimate=cost,
    )(x.astype(jnp.float32), w1, b1, w2, b2, w3, b3)
    return out


def init_params(key, input_, h, output_):
    """Deterministic init; weights stored as (in, out) = torch weight.T."""
    keys = jax.random.split(key, 6)

    def linear(kw, kb, fan_in, fan_out):
        bound = 1.0 / math.sqrt(fan_in)
        w = jax.random.uniform(kw, (fan_in, fan_out), jnp.float32, -bound, bound)
        b = jax.random.uniform(kb, (1, fan_out), jnp.float32, -bound, bound)
        return w, b

    w1, b1 = linear(keys[0], keys[1], input_, h[0])
    w2, b2 = linear(keys[2], keys[3], h[0], h[1])
    w3, b3 = linear(keys[4], keys[5], h[1], output_)
    return {"w1": w1, "b1": b1, "w2": w2, "b2": b2, "w3": w3, "b3": b3}


def _reference_f32(x, p):
    h = _gelu_exact(x @ p["w1"] + p["b1"])
    h = _gelu_exact(h @ p["w2"] + p["b2"])
    logits = h @ p["w3"] + p["b3"]
    return jax.nn.softmax(logits, axis=-1)


def _reference_bf16(x, p):
    # mirrors the kernel's operand quantization (bf16 operands, f32 accumulate)
    def mm(a, w):
        return jnp.dot(a.astype(jnp.bfloat16), w.astype(jnp.bfloat16),
                       preferred_element_type=jnp.float32)
    h = _gelu_exact(mm(x, p["w1"]) + p["b1"]).astype(jnp.bfloat16)
    h = _gelu_exact(mm(h, p["w2"]) + p["b2"]).astype(jnp.bfloat16)
    logits = mm(h, p["w3"]) + p["b3"]
    return jax.nn.softmax(logits, axis=-1)


if __name__ == "__main__":
    key = jax.random.PRNGKey(0)
    k_x, k_p = jax.random.split(key)

    # EdgeCategoryClass(input_=32, h=[64, 48], output_=16)
    input_, hidden, output_ = 32, (64, 48), 16
    params = init_params(k_p, input_, hidden, output_)
    prepped = prepare_params(params)   # one-time weight prep

    # small: trivial single-tile grid
    # even : multiple of the 8-row sublane granularity
    # ragged: exercises the masked partial last block (no explicit padding)
    for tag, batch in (("small", 8), ("even", 200), ("ragged", 203)):
        x = jax.random.normal(jax.random.fold_in(k_x, batch),
                              (batch, input_), dtype=jnp.float32)

        out = jax.block_until_ready(edge_category_forward(x, prepped))
        assert out.shape == (batch, output_), tag

        ref_bf = _reference_bf16(x, params)   # matches kernel operand dtypes
        ref_32 = _reference_f32(x, params)    # pure f32 semantics of the module

        assert jnp.allclose(out, ref_bf, atol=5e-3, rtol=5e-3), tag
        assert jnp.allclose(out, ref_32, atol=5e-2, rtol=5e-2), tag
        # NOTE: approx EUP reciprocal => rows sum to 1 within ~1e-3
        assert jnp.allclose(jnp.sum(out, axis=-1), 1.0, atol=1e-2), tag

    print("KERNEL_OK")
</pallas_src>

<mosaic_0001>
module attributes {stable_mosaic.version = 11 : i64} {
  func.func @edge_category_kernel(%arg0: i32, %arg1: memref<8x32xf32, #tpu.memory_space<vmem>>, %arg2: memref<32x64xbf16, #tpu.memory_space<vmem>>, %arg3: memref<1x64xf32, #tpu.memory_space<vmem>>, %arg4: memref<64x48xbf16, #tpu.memory_space<vmem>>, %arg5: memref<1x48xf32, #tpu.memory_space<vmem>>, %arg6: memref<48x128xbf16, #tpu.memory_space<vmem>>, %arg7: memref<1x128xf32, #tpu.memory_space<vmem>>, %arg8: memref<8x16xf32, #tpu.memory_space<vmem>>) attributes {dimension_semantics = [#tpu.dimension_semantics<parallel>], iteration_bounds = array<i64: 1>, scalar_prefetch = 0 : i64, scratch_operands = 0 : i64, tpu.core_type = #tpu.core_type<tc>, window_params = [{transform_indices = @transform_0, window_bounds = array<i64: 8, 32>}, {pipeline_mode = #tpu.pipeline_mode<synchronous>, transform_indices = @transform_1, window_bounds = array<i64: 32, 64>}, {pipeline_mode = #tpu.pipeline_mode<synchronous>, transform_indices = @transform_2, window_bounds = array<i64: 1, 64>}, {pipeline_mode = #tpu.pipeline_mode<synchronous>, transform_indices = @transform_3, window_bounds = array<i64: 64, 48>}, {pipeline_mode = #tpu.pipeline_mode<synchronous>, transform_indices = @transform_4, window_bounds = array<i64: 1, 48>}, {pipeline_mode = #tpu.pipeline_mode<synchronous>, transform_indices = @transform_5, window_bounds = array<i64: 48, 128>}, {pipeline_mode = #tpu.pipeline_mode<synchronous>, transform_indices = @transform_6, window_bounds = array<i64: 1, 128>}, {transform_indices = @transform_7, window_bounds = array<i64: 8, 16>}]} {
    %c0 = arith.constant 0 : index
    %c0_0 = arith.constant 0 : index
    %0 = vector.load %arg1[%c0, %c0_0] : memref<8x32xf32, #tpu.memory_space<vmem>>, vector<8x32xf32>
    %1 = arith.truncf %0 : vector<8x32xf32> to vector<8x32xbf16>
    %c0_1 = arith.constant 0 : index
    %c0_2 = arith.constant 0 : index
    %2 = vector.load %arg2[%c0_1, %c0_2] : memref<32x64xbf16, #tpu.memory_space<vmem>>, vector<32x64xbf16>
    %cst = arith.constant dense<0.000000e+00> : vector<8x64xf32>
    %3 = tpu.matmul %1, %2, %cst {dimension_numbers = #tpu.dot_dimension_numbers<[1], [0], [0], [1], [0, 0, 1, 1], [], []>} : vector<8x32xbf16>, vector<32x64xbf16>, vector<8x64xf32> -> vector<8x64xf32>
    %c0_3 = arith.constant 0 : index
    %c0_4 = arith.constant 0 : index
    %4 = vector.load %arg3[%c0_3, %c0_4] : memref<1x64xf32, #tpu.memory_space<vmem>>, vector<1x64xf32>
    %5 = vector.broadcast %4 : vector<1x64xf32> to vector<8x64xf32>
    %6 = arith.addf %3, %5 : vector<8x64xf32>
    %cst_5 = arith.constant 5.000000e-01 : f32
    %7 = vector.broadcast %cst_5 : f32 to vector<8x64xf32>
    %8 = arith.mulf %7, %6 : vector<8x64xf32>
    %cst_6 = arith.constant 0.707106769 : f32
    %9 = vector.broadcast %cst_6 : f32 to vector<8x64xf32>
    %10 = arith.mulf %6, %9 : vector<8x64xf32>
    %11 = math.erf %10 : vector<8x64xf32>
    %cst_7 = arith.constant 1.000000e+00 : f32
    %12 = vector.broadcast %cst_7 : f32 to vector<8x64xf32>
    %13 = arith.addf %12, %11 : vector<8x64xf32>
    %14 = arith.mulf %8, %13 : vector<8x64xf32>
    %15 = arith.truncf %14 : vector<8x64xf32> to vector<8x64xbf16>
    %c0_8 = arith.constant 0 : index
    %c0_9 = arith.constant 0 : index
    %16 = vector.load %arg4[%c0_8, %c0_9] : memref<64x48xbf16, #tpu.memory_space<vmem>>, vector<64x48xbf16>
    %cst_10 = arith.constant dense<0.000000e+00> : vector<8x48xf32>
    %17 = tpu.matmul %15, %16, %cst_10 {dimension_numbers = #tpu.dot_dimension_numbers<[1], [0], [0], [1], [0, 0, 1, 1], [], []>} : vector<8x64xbf16>, vector<64x48xbf16>, vector<8x48xf32> -> vector<8x48xf32>
    %c0_11 = arith.constant 0 : index
    %c0_12 = arith.constant 0 : index
    %18 = vector.load %arg5[%c0_11, %c0_12] : memref<1x48xf32, #tpu.memory_space<vmem>>, vector<1x48xf32>
    %19 = vector.broadcast %18 : vector<1x48xf32> to vector<8x48xf32>
    %20 = arith.addf %17, %19 : vector<8x48xf32>
    %cst_13 = arith.constant 5.000000e-01 : f32
    %21 = vector.broadcast %cst_13 : f32 to vector<8x48xf32>
    %22 = arith.mulf %21, %20 : vector<8x48xf32>
    %cst_14 = arith.constant 0.707106769 : f32
    %23 = vector.broadcast %cst_14 : f32 to vector<8x48xf32>
    %24 = arith.mulf %20, %23 : vector<8x48xf32>
    %25 = math.erf %24 : vector<8x48xf32>
    %cst_15 = arith.constant 1.000000e+00 : f32
    %26 = vector.broadcast %cst_15 : f32 to vector<8x48xf32>
    %27 = arith.addf %26, %25 : vector<8x48xf32>
    %28 = arith.mulf %22, %27 : vector<8x48xf32>
    %29 = arith.truncf %28 : vector<8x48xf32> to vector<8x48xbf16>
    %c0_16 = arith.constant 0 : index
    %c0_17 = arith.constant 0 : index
    %30 = vector.load %arg6[%c0_16, %c0_17] : memref<48x128xbf16, #tpu.memory_space<vmem>>, vector<48x128xbf16>
    %cst_18 = arith.constant dense<0.000000e+00> : vector<8x128xf32>
    %31 = tpu.matmul %29, %30, %cst_18 {dimension_numbers = #tpu.dot_dimension_numbers<[1], [0], [0], [1], [0, 0, 1, 1], [], []>} : vector<8x48xbf16>, vector<48x128xbf16>, vector<8x128xf32> -> vector<8x128xf32>
    %c0_19 = arith.constant 0 : index
    %c0_20 = arith.constant 0 : index
    %32 = vector.load %arg7[%c0_19, %c0_20] : memref<1x128xf32, #tpu.memory_space<vmem>>, vector<1x128xf32>
    %33 = vector.broadcast %32 : vector<1x128xf32> to vector<8x128xf32>
    %34 = arith.addf %31, %33 : vector<8x128xf32>
    %cst_21 = arith.constant dense<0xFF800000> : vector<8xf32>
    %35 = vector.multi_reduction <maximumf>, %34, %cst_21 [1] : vector<8x128xf32> to vector<8xf32>
    %36 = vector.shape_cast %35 : vector<8xf32> to vector<8x1xf32>
    %37 = vector.broadcast %36 : vector<8x1xf32> to vector<8x128xf32>
    %38 = arith.subf %34, %37 : vector<8x128xf32>
    %39 = math.exp %38 : vector<8x128xf32>
    %cst_22 = arith.constant dense<0.000000e+00> : vector<8xf32>
    %40 = vector.multi_reduction <add>, %39, %cst_22 [1] : vector<8x128xf32> to vector<8xf32>
    %41 = vector.shape_cast %40 : vector<8xf32> to vector<8x1xf32>
    %42 = tpu.reciprocal %41 {approx = true} : vector<8x1xf32> -> vector<8x1xf32>
    %43 = vector.broadcast %42 : vector<8x1xf32> to vector<8x128xf32>
    %44 = arith.mulf %39, %43 : vector<8x128xf32>
    %45 = vector.extract_strided_slice %44 {offsets = [0, 0], sizes = [8, 16], strides = [1, 1]} : vector<8x128xf32> to vector<8x16xf32>
    %c0_23 = arith.constant 0 : index
    %c0_24 = arith.constant 0 : index
    %46 = vector.load %arg8[%c0_23, %c0_24] : memref<8x16xf32, #tpu.memory_space<vmem>>, vector<8x16xf32>
    tpu.vector_store %arg8[%c0_23, %c0_24], %45 {strides = array<i32>} : memref<8x16xf32, #tpu.memory_space<vmem>>, vector<8x16xf32>,
    return
  }
  func.func @transform_0(%arg0: i32) -> (i32, i32) {
    %c0_i32 = arith.constant 0 : i32
    %c0_i32_0 = arith.constant 0 : i32
    return %arg0, %c0_i32 : i32, i32
  }
  func.func @transform_1(%arg0: i32) -> (i32, i32) {
    %c0_i32 = arith.constant 0 : i32
    %c0_i32_0 = arith.constant 0 : i32
    %c0_i32_1 = arith.constant 0 : i32
    return %c0_i32, %c0_i32_0 : i32, i32
  }
  func.func @transform_2(%arg0: i32) -> (i32, i32) {
    %c0_i32 = arith.constant 0 : i32
    %c0_i32_0 = arith.constant 0 : i32
    %c0_i32_1 = arith.constant 0 : i32
    return %c0_i32, %c0_i32_0 : i32, i32
  }
  func.func @transform_3(%arg0: i32) -> (i32, i32) {
    %c0_i32 = arith.constant 0 : i32
    %c0_i32_0 = arith.constant 0 : i32
    %c0_i32_1 = arith.constant 0 : i32
    return %c0_i32, %c0_i32_0 : i32, i32
  }
  func.func @transform_4(%arg0: i32) -> (i32, i32) {
    %c0_i32 = arith.constant 0 : i32
    %c0_i32_0 = arith.constant 0 : i32
    %c0_i32_1 = arith.constant 0 : i32
    return %c0_i32, %c0_i32_0 : i32, i32
  }
  func.func @transform_5(%arg0: i32) -> (i32, i32) {
    %c0_i32 = arith.constant 0 : i32
    %c0_i32_0 = arith.constant 0 : i32
    %c0_i32_1 = arith.constant 0 : i32
    return %c0_i32, %c0_i32_0 : i32, i32
  }
  func.func @transform_6(%arg0: i32) -> (i32, i32) {
    %c0_i32 = arith.constant 0 : i32
    %c0_i32_0 = arith.constant 0 : i32
    %c0_i32_1 = arith.constant 0 : i32
    return %c0_i32, %c0_i32_0 : i32, i32
  }
  func.func @transform_7(%arg0: i32) -> (i32, i32) {
    %c0_i32 = arith.constant 0 : i32
    %c0_i32_0 = arith.constant 0 : i32
    return %arg0, %c0_i32 : i32, i32
  }
}

</mosaic_0001>

<llo_original>
// kernel: tpu_custom_call.1
$region0: #{tpu_custom_call.1}
  #allocation0 [shape = 'u32[]', space=smem, size = 0x4, offset = 0x4, fixed_abs, tag = 'smem constant byte address 0x4 - core index']
  #allocation1 [shape = 'u32[144,128]{1,0:T(1,128)}', space=vmem, size = 0x12000, scoped, tag = 'internal scratch']
  %s0 = inlined_call_operand.vmem [shape: f32[8,32], index: 0, kind: input, shape index: {}]
  %s1 = inlined_call_operand.vmem [shape: bf16[32,64], index: 1, kind: input, shape index: {}]
  %s2 = inlined_call_operand.vmem [shape: f32[1,64], index: 2, kind: input, shape index: {}]
  %s3 = inlined_call_operand.vmem [shape: bf16[64,48], index: 3, kind: input, shape index: {}]
  %s4 = inlined_call_operand.vmem [shape: f32[1,48], index: 4, kind: input, shape index: {}]
  %s5 = inlined_call_operand.vmem [shape: bf16[48,128], index: 5, kind: input, shape index: {}]
  %s6 = inlined_call_operand.vmem [shape: f32[1,128], index: 6, kind: input, shape index: {}]
  %s7 = inlined_call_operand.hbm [shape: f32[8,16], index: 7, kind: output, shape index: {}]
  %s8 = sld [smem:[#allocation0]]
  $region38: #{tpu_custom_call.1} parent=0
    _
  %s10 = ssub.s32 1, %s8
  %s11 = scalar_select 0, %s10, %s8
  $region1: #{tpu_custom_call.1} parent=0
    #allocation2 [shape = 'u8[4096]{0}', space=vmem, size = 0x1000, scoped, tag = 'output window, operand 0, single buffered']
    #allocation3 [shape = 's32[1]{0}', space=sflag, size = 0x4, scoped, tag = 'scoped memory for tpu_custom_call.1']
    %12 = vsyncpa [#allocation3], 0
    // Predicated region
    $region2: #{tpu_custom_call.1} parent=1 // pred_check
      _
    $region3: #{tpu_custom_call.1} parent=1 // pred_check_branch
      %14 = sbr.rel (0) target = $region5
    $region4: #{tpu_custom_call.1} parent=1 // pred_region
      _
    $region5: #{tpu_custom_call.1} parent=1 // pred_fallthru
      _
    // Predicated region
    $region6: #{tpu_custom_call.1} parent=1 // pred_check
      _
    $region7: #{tpu_custom_call.1} parent=1 // pred_check_branch
      %16 = sbr.rel (0) target = $region9
    $region8: #{tpu_custom_call.1} parent=1 // pred_region
      _
    $region9: #{tpu_custom_call.1} parent=1 // pred_fallthru
      _
    // Predicated region
    $region10: #{tpu_custom_call.1} parent=1 // pred_check
      _
    $region11: #{tpu_custom_call.1} parent=1 // pred_check_branch
      %18 = sbr.rel (0) target = $region13
    $region12: #{tpu_custom_call.1} parent=1 // pred_region
      _
    $region13: #{tpu_custom_call.1} parent=1 // pred_fallthru
      _
    // Predicated region
    $region14: #{tpu_custom_call.1} parent=1 // pred_check
      _
    $region15: #{tpu_custom_call.1} parent=1 // pred_check_branch
      %20 = sbr.rel (0) target = $region17
    $region16: #{tpu_custom_call.1} parent=1 // pred_region
      _
    $region17: #{tpu_custom_call.1} parent=1 // pred_fallthru
      _
    // Predicated region
    $region18: #{tpu_custom_call.1} parent=1 // pred_check
      _
    $region19: #{tpu_custom_call.1} parent=1 // pred_check_branch
      %22 = sbr.rel (0) target = $region21
    $region20: #{tpu_custom_call.1} parent=1 // pred_region
      _
    $region21: #{tpu_custom_call.1} parent=1 // pred_fallthru
      _
    // Predicated region
    $region22: #{tpu_custom_call.1} parent=1 // pred_check
      _
    $region23: #{tpu_custom_call.1} parent=1 // pred_check_branch
      %24 = sbr.rel (0) target = $region25
    $region24: #{tpu_custom_call.1} parent=1 // pred_region
      _
    $region25: #{tpu_custom_call.1} parent=1 // pred_fallthru
      _
    // Predicated region
    $region26: #{tpu_custom_call.1} parent=1 // pred_check
      _
    $region27: #{tpu_custom_call.1} parent=1 // pred_check_branch
      %26 = sbr.rel (0) target = $region29
    $region28: #{tpu_custom_call.1} parent=1 // pred_region
      _
    $region29: #{tpu_custom_call.1} parent=1 // pred_fallthru
      _
    %v28 = vld [vmem:[%s0] sm:$0xff]
    %v29 = vpack.c.bf16 %v28, %v28
    %v30 = vld [vmem:[%s1] sm:$0xf]
    %v31 = vld [vmem:[%s1 + $0x4] sm:$0xf]
    %v32 = vld [vmem:[%s1 + $0x8] sm:$0xf]
    %v33 = vld [vmem:[%s1 + $0xc] sm:$0xf]
    %v34 = vld [vmem:[%s2] sm:$0x1]
    %v36 = vlaneseq
    %v37 = vshrl.u32 %v36, 7
    %v38 = vsub.s32 0, %v37
    %v39 = vrot.slane %v34, %v38
    %v45 = vunpack.c.l.b16 %v30
    %v46 = vunpack.c.l.b16 %v31
    %v47 = vunpack.c.l.b16 %v32
    %v48 = vunpack.c.l.b16 %v33
    %v49 = vpack.c.b16 %v46, %v45
    %v50 = vpack.c.b16 %v48, %v47
    %vm53 = vcmask 261120
    %v55 = vsel %vm53, %v29, 0
    %57 = vmatprep.subr.bf16.mxu0 0
    %58 = vmatpush1.bf16.msra.mxu0 0
    %59 = vmatprep.subr.bf16.mxu0 0
    %60 = vmatpush1.bf16.msra.mxu0 0
    %61 = vmatprep.subr.bf16.mxu0 0
    %62 = vmatpush1.bf16.msra.mxu0 0
    %63 = vmatprep.subr.bf16.mxu0 0
    %64 = vmatpush1.bf16.msra.mxu0 0
    %65 = vmatprep.subr.bf16.mxu0 0
    %66 = vmatpush1.bf16.msra.mxu0 0
    %67 = vmatprep.subr.bf16.mxu0 0
    %68 = vmatpush1.bf16.msra.mxu0 0
    %69 = vmatprep.subr.bf16.mxu0 0
    %70 = vmatpush1.bf16.msra.mxu0 %v50
    %71 = vmatprep.subr.bf16.mxu0 0
    %72 = vmatpush1.bf16.msra.mxu0 %v49
    %73 = vmatprep.subr.bf16.mxu0 0
    %74 = vmatpush2.bf16.msra.mxu0 0
    %75 = vmatprep.subr.bf16.mxu0 0
    %76 = vmatpush2.bf16.msra.mxu0 0
    %77 = vmatprep.subr.bf16.mxu0 0
    %78 = vmatpush2.bf16.msra.mxu0 0
    %79 = vmatprep.subr.bf16.mxu0 0
    %80 = vmatpush2.bf16.msra.mxu0 0
    %81 = vmatprep.subr.bf16.mxu0 0
    %82 = vmatpush2.bf16.msra.mxu0 0
    %83 = vmatprep.subr.bf16.mxu0 0
    %84 = vmatpush2.bf16.msra.mxu0 0
    %85 = vmatprep.subr.bf16.mxu0 0
    %86 = vmatpush2.bf16.msra.mxu0 0
    %87 = vmatprep.subr.bf16.mxu0 0
    %88 = vmatpush2.bf16.msra.mxu0 0
    %89 = vmatprep.mubr.bf16.mxu0 0
    %90 = vmatmul.mubr.bf16.gmra.mxu0 %v55
    %v91 = vpop.f32.mrf.mxu0
    %v92 = vadd.f32 %v39, %v91
    %v93 = vpop.f32.mrf.mxu0
    %v94 = vpop.f32.mrf.mxu0
    %v95 = vpop.f32.mrf.mxu0
    %96 = vdwg.mxu0
    %v97 = vmul.f32 %v92, 0.5
    %v98 = vmul.f32 %v92, 0.70710677
    %v99 = verf.f32.pop %v98
    %v100 = vadd.f32 %v99, 1.0
    %v101 = vmul.f32 %v97, %v100
    %v102 = vpack.c.bf16 %v101, %v101
    %v103 = vld [vmem:[%s3] sm:$0xf]
    %v104 = vld [vmem:[%s3 + $0x4] sm:$0xf]
    %v105 = vld [vmem:[%s3 + $0x8] sm:$0xf]
    %v106 = vld [vmem:[%s3 + $0xc] sm:$0xf]
    %v107 = vld [vmem:[%s3 + $0x10] sm:$0xf]
    %v108 = vld [vmem:[%s3 + $0x14] sm:$0xf]
    %v109 = vld [vmem:[%s3 + $0x18] sm:$0xf]
    %v110 = vld [vmem:[%s3 + $0x1c] sm:$0xf]
    %v111 = vld [vmem:[%s4] sm:$0x1]
    %v113 = vlaneseq
    %v114 = vshrl.u32 %v113, 7
    %v115 = vsub.s32 0, %v114
    %v116 = vrot.slane %v111, %v115
    %v126 = vunpack.c.l.b16 %v103
    %v127 = vunpack.c.l.b16 %v104
    %v128 = vunpack.c.l.b16 %v105
    %v129 = vunpack.c.l.b16 %v106
    %v130 = vunpack.c.l.b16 %v107
    %v131 = vunpack.c.l.b16 %v108
    %v132 = vunpack.c.l.b16 %v109
    %v133 = vunpack.c.l.b16 %v110
    %v134 = vpack.c.b16 %v127, %v126
    %v135 = vpack.c.b16 %v129, %v128
    %v136 = vpack.c.b16 %v131, %v130
    %v137 = vpack.c.b16 %v133, %v132
    %vm142 = vcmask 523264
    %v144 = vsel %vm142, %v102, 0
    %146 = vmatprep.subr.bf16.mxu0 0
    %147 = vmatpush1.bf16.msra.mxu0 0
    %148 = vmatprep.subr.bf16.mxu0 0
    %149 = vmatpush1.bf16.msra.mxu0 0
    %150 = vmatprep.subr.bf16.mxu0 0
    %151 = vmatpush1.bf16.msra.mxu0 0
    %152 = vmatprep.subr.bf16.mxu0 0
    %153 = vmatpush1.bf16.msra.mxu0 0
    %154 = vmatprep.subr.bf16.mxu0 0
    %155 = vmatpush1.bf16.msra.mxu0 %v137
    %156 = vmatprep.subr.bf16.mxu0 0
    %157 = vmatpush1.bf16.msra.mxu0 %v136
    %158 = vmatprep.subr.bf16.mxu0 0
    %159 = vmatpush1.bf16.msra.mxu0 %v135
    %160 = vmatprep.subr.bf16.mxu0 0
    %161 = vmatpush1.bf16.msra.mxu0 %v134
    %162 = vmatprep.subr.bf16.mxu0 0
    %163 = vmatpush2.bf16.msra.mxu0 0
    %164 = vmatprep.subr.bf16.mxu0 0
    %165 = vmatpush2.bf16.msra.mxu0 0
    %166 = vmatprep.subr.bf16.mxu0 0
    %167 = vmatpush2.bf16.msra.mxu0 0
    %168 = vmatprep.subr.bf16.mxu0 0
    %169 = vmatpush2.bf16.msra.mxu0 0
    %170 = vmatprep.subr.bf16.mxu0 0
    %171 = vmatpush2.bf16.msra.mxu0 0
    %172 = vmatprep.subr.bf16.mxu0 0
    %173 = vmatpush2.bf16.msra.mxu0 0
    %174 = vmatprep.subr.bf16.mxu0 0
    %175 = vmatpush2.bf16.msra.mxu0 0
    %176 = vmatprep.subr.bf16.mxu0 0
    %177 = vmatpush2.bf16.msra.mxu0 0
    %178 = vmatprep.mubr.bf16.mxu0 0
    %179 = vmatmul.mubr.bf16.gmra.mxu0 %v144
    %v180 = vpop.f32.mrf.mxu0
    %v181 = vadd.f32 %v116, %v180
    %v182 = vpop.f32.mrf.mxu0
    %v183 = vpop.f32.mrf.mxu0
    %v184 = vpop.f32.mrf.mxu0
    %185 = vdwg.mxu0
    %v186 = vmul.f32 %v181, 0.5
    %v187 = vmul.f32 %v181, 0.70710677
    %v188 = verf.f32.pop %v187
    %v189 = vadd.f32 %v188, 1.0
    %v190 = vmul.f32 %v186, %v189
    %v191 = vpack.c.bf16 %v190, %v190
    %v192 = vld [vmem:[%s5] sm:$0xf]
    %v193 = vld [vmem:[%s5 + $0x4] sm:$0xf]
    %v194 = vld [vmem:[%s5 + $0x8] sm:$0xf]
    %v195 = vld [vmem:[%s5 + $0xc] sm:$0xf]
    %v196 = vld [vmem:[%s5 + $0x10] sm:$0xf]
    %v197 = vld [vmem:[%s5 + $0x14] sm:$0xf]
    %v198 = vld [vmem:[%s6] sm:$0x1]
    %v200 = vlaneseq
    %v201 = vshrl.u32 %v200, 7
    %v202 = vsub.s32 0, %v201
    %v203 = vrot.slane %v198, %v202
    %v211 = vunpack.c.l.b16 %v192
    %v212 = vunpack.c.l.b16 %v193
    %v213 = vunpack.c.l.b16 %v194
    %v214 = vunpack.c.l.b16 %v195
    %v215 = vunpack.c.l.b16 %v196
    %v216 = vunpack.c.l.b16 %v197
    %v217 = vpack.c.b16 %v212, %v211
    %v218 = vpack.c.b16 %v214, %v213
    %v219 = vpack.c.b16 %v216, %v215
    %vm223 = vcmask 392192
    %v225 = vsel %vm223, %v191, 0
    %227 = vmatprep.subr.bf16.mxu0 0
    %228 = vmatpush1.bf16.msra.mxu0 0
    %229 = vmatprep.subr.bf16.mxu0 0
    %230 = vmatpush1.bf16.msra.mxu0 0
    %231 = vmatprep.subr.bf16.mxu0 0
    %232 = vmatpush1.bf16.msra.mxu0 0
    %233 = vmatprep.subr.bf16.mxu0 0
    %234 = vmatpush1.bf16.msra.mxu0 0
    %235 = vmatprep.subr.bf16.mxu0 0
    %236 = vmatpush1.bf16.msra.mxu0 0
    %237 = vmatprep.subr.bf16.mxu0 0
    %238 = vmatpush1.bf16.msra.mxu0 %v219
    %239 = vmatprep.subr.bf16.mxu0 0
    %240 = vmatpush1.bf16.msra.mxu0 %v218
    %241 = vmatprep.subr.bf16.mxu0 0
    %242 = vmatpush1.bf16.msra.mxu0 %v217
    %243 = vmatprep.subr.bf16.mxu0 0
    %244 = vmatpush2.bf16.msra.mxu0 0
    %245 = vmatprep.subr.bf16.mxu0 0
    %246 = vmatpush2.bf16.msra.mxu0 0
    %247 = vmatprep.subr.bf16.mxu0 0
    %248 = vmatpush2.bf16.msra.mxu0 0
    %249 = vmatprep.subr.bf16.mxu0 0
    %250 = vmatpush2.bf16.msra.mxu0 0
    %251 = vmatprep.subr.bf16.mxu0 0
    %252 = vmatpush2.bf16.msra.mxu0 0
    %253 = vmatprep.subr.bf16.mxu0 0
    %254 = vmatpush2.bf16.msra.mxu0 0
    %255 = vmatprep.subr.bf16.mxu0 0
    %256 = vmatpush2.bf16.msra.mxu0 0
    %257 = vmatprep.subr.bf16.mxu0 0
    %258 = vmatpush2.bf16.msra.mxu0 0
    %259 = vmatprep.mubr.bf16.mxu0 0
    %260 = vmatmul.mubr.bf16.gmra.mxu0 %v225
    %v261 = vpop.f32.mrf.mxu0
    %v262 = vadd.f32 %v203, %v261
    %v263 = vpop.f32.mrf.mxu0
    %v264 = vpop.f32.mrf.mxu0
    %v265 = vpop.f32.mrf.mxu0
    %266 = vdwg.mxu0
    %267 = vmax.xlane.f32.xlu0 %v262
    %v268 = vpop.xlane.xlu0 %267
    %v269 = vsub.f32 %v262, %v268
    %v270 = vmul.f32 %v269, 1.442695
    %v271 = vpow.pop %v270
    %272 = vadd.xlane.f32.xlu0 %v271
    %v273 = vpop.xlane.xlu0 %272
    %v274 = vrcp.pop %v273
    %v275 = vmul.f32 %v271, %v274
    %vm276 = vcmask 130048
    %277 = vst.msk [vmem:[#allocation2] sm:$0xff] %vm276, %v275
    // Predicated region
    $region30: #{tpu_custom_call.1} parent=1 // pred_check
      _
    $region31: #{tpu_custom_call.1} parent=1 // pred_check_branch
      %279 = sbr.rel (0) target = $region33
    $region32: #{tpu_custom_call.1} parent=1 // pred_region
      %s281 = ssub.s32 128, 128
      %282 = vsyncadd [#allocation3], %s281
      %s284 = sshll.u32 [#allocation2], 4
      %s285 = int_to_ptr.vmem [resolvable:$true] %s284
      %287 = dma.vmem_to_hbm [thread:$0]  %s285, 128, %s7, [#allocation3]
    $region33: #{tpu_custom_call.1} parent=1 // pred_fallthru
      _
    // Predicated region
    $region34: #{tpu_custom_call.1} parent=1 // pred_check
      _
    $region35: #{tpu_custom_call.1} parent=1 // pred_check_branch
      %289 = sbr.rel (0) target = $region37
    $region36: #{tpu_custom_call.1} parent=1 // pred_region
      %290 = dma.done [#allocation3], 128
    $region37: #{tpu_custom_call.1} parent=1 // pred_fallthru
      _
    %291 = vsyncpa [#allocation3], 1

</llo_original>
